<compile_context>
chip_gen: v5e
topology: v5e:2x2
jax: 0.10.0
libtpu: 0.0.40
codegen_flags: <defaults>
</compile_context>

<pallas_src>
import jax
import jax.numpy as jnp
from jax.experimental import pallas as pl
from jax.experimental.pallas import tpu as pltpu


def _uncertainty_kernel(packed_ref, out_ref):
    # packed_ref: (2, L) VMEM tile; row 0 = ln_sigma_2, row 1 = losses.
    # out_ref: (1, 1) SMEM scalar.
    packed = packed_ref[...].astype(jnp.float32)          # (2, L) in f32
    ln_sig = packed[0:1, :]                                # (1, L)
    losses = packed[1:2, :]                                # (1, L)
    # elementwise: 0.5 * (exp(-s) * loss + s), then full reduction to a scalar
    weighted = 0.5 * (jnp.exp(-ln_sig) * losses + ln_sig)
    out_ref[0, 0] = jnp.sum(weighted)


def uncertainty_loss(losses: jax.Array, ln_sigma_2: jax.Array) -> jax.Array:
    """Returns the scalar weighted loss (float32)."""
    L = losses.shape[0]
    # Single packed input: one DMA instead of two. With allow_input_fusion the
    # stack/producer can be fused into the kernel's input DMA.
    packed = jnp.stack(
        [ln_sigma_2.reshape(L), losses.reshape(L)], axis=0
    )  # (2, L), length-L axis on the lane dimension

    out = pl.pallas_call(
        _uncertainty_kernel,
        out_shape=jax.ShapeDtypeStruct((1, 1), jnp.float32),
        in_specs=[
            pl.BlockSpec((2, L), lambda: (0, 0)),          # full (2, L) tile
        ],
        out_specs=pl.BlockSpec(memory_space=pltpu.MemorySpace.SMEM),
        compiler_params=pltpu.CompilerParams(
            allow_input_fusion=[True],
        ),
        cost_estimate=pl.CostEstimate(
            flops=3 * L,               # mul + mul + add per element (plus tiny sum)
            transcendentals=L,         # exp per element
            bytes_accessed=2 * 4 * L + 4,
        ),
    )(packed)
    return out[0, 0]


if __name__ == "__main__":
    num_losses = 8

    # Deterministic parameter init, matching nn.Parameter(torch.ones(num_losses)).
    ln_sigma_2 = jnp.ones((num_losses,), dtype=jnp.float32)

    # Deterministic example "losses" input.
    key = jax.random.PRNGKey(0)
    losses = jax.random.uniform(key, (num_losses,), dtype=jnp.float32)

    result = uncertainty_loss(losses, ln_sigma_2)
    result = jax.block_until_ready(result)

    # Reference check in plain JAX.
    ref = jnp.sum(0.5 * (jnp.exp(-ln_sigma_2) * losses + ln_sigma_2))
    assert jnp.allclose(result, ref, rtol=1e-5, atol=1e-6), (result, ref)

    print("KERNEL_OK")
</pallas_src>

<mosaic_0001>
module attributes {stable_mosaic.version = 11 : i64} {
  func.func @_uncertainty_kernel(%arg0: memref<2x8xf32, #tpu.memory_space<vmem>>, %arg1: memref<1x1xf32, #tpu.memory_space<smem>>) attributes {dimension_semantics = [], scalar_prefetch = 0 : i64, scratch_operands = 0 : i64, tpu.core_type = #tpu.core_type<tc>} {
    %c0 = arith.constant 0 : index
    %c0_0 = arith.constant 0 : index
    %0 = vector.load %arg0[%c0, %c0_0] : memref<2x8xf32, #tpu.memory_space<vmem>>, vector<2x8xf32>
    %1 = vector.extract_strided_slice %0 {offsets = [0, 0], sizes = [1, 8], strides = [1, 1]} : vector<2x8xf32> to vector<1x8xf32>
    %2 = vector.extract_strided_slice %0 {offsets = [1, 0], sizes = [1, 8], strides = [1, 1]} : vector<2x8xf32> to vector<1x8xf32>
    %cst = arith.constant 0.000000e+00 : f32
    %3 = vector.broadcast %cst : f32 to vector<1x8xf32>
    %4 = arith.subf %3, %1 : vector<1x8xf32>
    %5 = math.exp %4 : vector<1x8xf32>
    %6 = arith.mulf %5, %2 : vector<1x8xf32>
    %7 = arith.addf %6, %1 : vector<1x8xf32>
    %cst_1 = arith.constant 5.000000e-01 : f32
    %8 = vector.broadcast %cst_1 : f32 to vector<1x8xf32>
    %9 = arith.mulf %8, %7 : vector<1x8xf32>
    %10 = vector.shape_cast %9 : vector<1x8xf32> to vector<1x1x8xf32>
    %cst_2 = arith.constant dense<0.000000e+00> : vector<1xf32>
    %11 = vector.multi_reduction <add>, %10, %cst_2 [1, 2] : vector<1x1x8xf32> to vector<1xf32>
    %12 = vector.shape_cast %11 : vector<1xf32> to vector<1x1x1xf32>
    %13 = vector.extract %12[0, 0, 0] : f32 from vector<1x1x1xf32>
    %c0_3 = arith.constant 0 : index
    %c0_4 = arith.constant 0 : index
    %14 = memref.load %arg1[%c0_3, %c0_4] : memref<1x1xf32, #tpu.memory_space<smem>>
    memref.store %13, %arg1[%c0_3, %c0_4] : memref<1x1xf32, #tpu.memory_space<smem>>
    return
  }
}

</mosaic_0001>

<llo_original>
// kernel: tpu_custom_call.1
$region0: #{tpu_custom_call.1}
  #allocation0 [shape = 'u32[]', space=smem, size = 0x4, offset = 0x4, fixed_abs, tag = 'smem constant byte address 0x4 - core index']
  #allocation1 [shape = 'u32[72,128]{1,0:T(1,128)}', space=vmem, size = 0x9000, scoped, tag = 'internal scratch']
  %s0 = inlined_call_operand.hbm [shape: f32[2,8], index: 0, kind: input, shape index: {}]
  %s1 = inlined_call_operand.hbm [shape: f32[1,1], index: 1, kind: output, shape index: {}]
  %s2 = sld [smem:[#allocation0]]
  $region18: #{tpu_custom_call.1} parent=0
    _
  %s4 = ssub.s32 1, %s2
  %s5 = scalar_select 0, %s4, %s2
  $region1: #{tpu_custom_call.1} parent=0
    #allocation2 [shape = 'u8[1024]{0}', space=vmem, size = 0x400, scoped, tag = 'input window, operand 0, single buffered']
    #allocation3 [shape = 's32[1]{0}', space=sflag, size = 0x4, scoped, tag = 'scoped memory for tpu_custom_call.1']
    #allocation4 [shape = 's32[1]{0}', space=sflag, size = 0x4, scoped, tag = 'scoped memory for tpu_custom_call.1']
    #allocation5 [shape = 'u8[512]{0}', space=smem, size = 0x200, scoped, tag = 'output window, operand 0, single buffered']
    %6 = vsyncpa [#allocation3], 0
    %7 = vsyncpa [#allocation4], 0
    // Predicated region
    $region2: #{tpu_custom_call.1} parent=1 // pred_check
      _
    $region3: #{tpu_custom_call.1} parent=1 // pred_check_branch
      %9 = sbr.rel (0) target = $region5
    $region4: #{tpu_custom_call.1} parent=1 // pred_region
      %11 = vsyncadd [#allocation3], 0
      %s13 = sshll.u32 %s0, 4
      %s14 = int_to_ptr.hbm [resolvable:$true] %s13
      %s15 = sshll.u32 [#allocation2], 4
      %s16 = int_to_ptr.vmem [resolvable:$true] %s15
      %18 = dma.hbm_to_vmem [thread:$0]  %s14, 32, %s16, [#allocation3]
    $region5: #{tpu_custom_call.1} parent=1 // pred_fallthru
      _
    // Predicated region
    $region6: #{tpu_custom_call.1} parent=1 // pred_check
      _
    $region7: #{tpu_custom_call.1} parent=1 // pred_check_branch
      %20 = sbr.rel (0) target = $region9
    $region8: #{tpu_custom_call.1} parent=1 // pred_region
      %22 = dma.done [#allocation3], 32
    $region9: #{tpu_custom_call.1} parent=1 // pred_fallthru
      _
    %v23 = vld [vmem:[#allocation2] sm:$0x3]
    %v24 = vsub.f32 0.0, %v23
    %v25 = vmul.f32 %v24, 1.442695
    %v26 = vpow.pop %v25
    %v28 = vrot.slane %v23, 1
    %v30 = vmul.f32 %v26, %v28
    %v31 = vadd.f32 %v30, %v23
    %v32 = vmul.f32 %v31, 0.5
    %vm33 = vcmask 57344
    %v34 = vsel %vm33, %v32, 0.0
    %35 = vadd.xlane.f32.xlu0 %v34
    %v36 = vpop.xlane.xlu0 %35
    %v37 = vrot.slane %v36, 4
    %v38 = vadd.f32 %v36, %v37
    %v39 = vrot.slane %v38, 2
    %v40 = vadd.f32 %v38, %v39
    %v41 = vrot.slane %v40, 1
    %v42 = vadd.f32 %v40, %v41
    %s43 = vtos %v42
    %s44 = scalar_lea.smem [#allocation5], 0
    %45 = sst [smem:[%s44]] %s43
    // Predicated region
    $region10: #{tpu_custom_call.1} parent=1 // pred_check
      _
    $region11: #{tpu_custom_call.1} parent=1 // pred_check_branch
      %47 = sbr.rel (0) target = $region13
    $region12: #{tpu_custom_call.1} parent=1 // pred_region
      %49 = vsyncadd [#allocation4], 0
      %s51 = sshll.u32 %s1, 4
      %s52 = int_to_ptr.hbm [resolvable:$true] %s51
      %54 = dma.smem_to_hbm [#allocation5], 16, %s52, [#allocation4]
    $region13: #{tpu_custom_call.1} parent=1 // pred_fallthru
      _
    // Predicated region
    $region14: #{tpu_custom_call.1} parent=1 // pred_check
      _
    $region15: #{tpu_custom_call.1} parent=1 // pred_check_branch
      %56 = sbr.rel (0) target = $region17
    $region16: #{tpu_custom_call.1} parent=1 // pred_region
      %58 = dma.done [#allocation4], 16
    $region17: #{tpu_custom_call.1} parent=1 // pred_fallthru
      _
    %59 = sfence
    %60 = vsyncpa [#allocation3], 1
    %61 = vsyncpa [#allocation4], 1

</llo_original>
